<compile_context>
chip_gen: v6e
topology: v6e:2x2x1
jax: 0.10.0
libtpu: 0.0.40
codegen_flags: <defaults>
</compile_context>

<pallas_src>
import functools
import math

import jax
import jax.numpy as jnp
from jax.experimental import pallas as pl
from jax.experimental.pallas import tpu as pltpu


def _round_up(x, m):
    return (x + m - 1) // m * m


# ---------------------------------------------------------------------------
# Fully fused MLP kernel: grid only over batch-row tiles.
# refs = (x_ref, w0_ref, b0_ref, w1_ref, b1_ref, ..., o_ref)
# ---------------------------------------------------------------------------
def _mlp_fused_kernel(*refs, n_layers, compute_dtype):
    x_ref = refs[0]
    o_ref = refs[1 + 2 * n_layers]

    h = x_ref[...]
    for i in range(n_layers):
        w_ref = refs[1 + 2 * i]
        b_ref = refs[2 + 2 * i]
        y = jnp.dot(
            h.astype(compute_dtype),
            w_ref[...].astype(compute_dtype),
            preferred_element_type=jnp.float32,
        )
        y = y + b_ref[...].astype(jnp.float32)
        if i < n_layers - 1:
            y = jnp.tanh(y)  # epilogue stays f32 (v5e EUP has no bf16)
        h = y
    o_ref[...] = h.astype(o_ref.dtype)


def mlp_fused_pallas(x, params, *, compute_dtype=jnp.float32, tm_max=256):
    """Run the whole MLP in one pallas_call. x:(M,K0), params:[(W_kn, b), ...]."""
    M, K0 = x.shape
    n_layers = len(params)
    sizes = [K0] + [w.shape[1] for (w, _) in params]
    n_out = sizes[-1]

    # Row tile: as big as the batch (rounded to a sublane multiple), capped.
    tm = min(_round_up(M, 8), tm_max)
    m_pad = _round_up(M, tm)
    if m_pad != M:
        x = jnp.pad(x, ((0, m_pad - M), (0, 0)))

    in_specs = [pl.BlockSpec((tm, K0), lambda i: (i, 0))]
    args = [x]
    for (w, b) in params:
        k, n = w.shape
        # Full-extent, grid-invariant blocks: weights/biases stay in VMEM.
        in_specs.append(pl.BlockSpec((k, n), lambda i: (0, 0)))
        in_specs.append(pl.BlockSpec((1, n), lambda i: (0, 0)))
        args.append(w)
        args.append(b.reshape(1, n))

    out_spec = pl.BlockSpec((tm, n_out), lambda i: (i, 0))

    itemsize = jnp.dtype(x.dtype).itemsize
    flops = 2 * m_pad * sum(a * b for a, b in zip(sizes[:-1], sizes[1:]))
    transcendentals = m_pad * sum(sizes[1:-1])  # tanh on every hidden activation
    bytes_accessed = (
        m_pad * K0 * itemsize
        + sum(w.size * jnp.dtype(w.dtype).itemsize
              + b.size * jnp.dtype(b.dtype).itemsize for w, b in params)
        + m_pad * n_out * itemsize
    )

    kernel = functools.partial(
        _mlp_fused_kernel, n_layers=n_layers, compute_dtype=compute_dtype
    )

    out = pl.pallas_call(
        kernel,
        out_shape=jax.ShapeDtypeStruct((m_pad, n_out), x.dtype),
        grid_spec=pltpu.PrefetchScalarGridSpec(
            num_scalar_prefetch=0,
            grid=(m_pad // tm,),
            in_specs=in_specs,
            out_specs=out_spec,
        ),
        compiler_params=pltpu.CompilerParams(
            dimension_semantics=("parallel",),
        ),
        cost_estimate=pl.CostEstimate(
            flops=int(flops),
            transcendentals=int(transcendentals),
            bytes_accessed=int(bytes_accessed),
        ),
    )(*args)

    return out[:M] if m_pad != M else out


# ---------------------------------------------------------------------------
# Per-layer fallback (used only when weights are too big to hold in VMEM):
# one fused matmul + bias (+ tanh) kernel, tiled over (M, N), full K in-block.
# ---------------------------------------------------------------------------
def _linear_kernel(x_ref, w_ref, b_ref, o_ref, *, apply_act, compute_dtype):
    y = jnp.dot(
        x_ref[...].astype(compute_dtype),
        w_ref[...].astype(compute_dtype),
        preferred_element_type=jnp.float32,
    )
    y = y + b_ref[...].astype(jnp.float32)
    if apply_act:
        y = jnp.tanh(y)
    o_ref[...] = y.astype(o_ref.dtype)


def linear_pallas(x, w_kn, b, *, apply_act, compute_dtype=jnp.float32,
                  tm_max=128, tn=256):
    M, K = x.shape
    Kw, N = w_kn.shape
    assert K == Kw

    tm = min(_round_up(M, 8), tm_max)
    m_pad = _round_up(M, tm)
    if N > tn:
        tn_eff = tn
        n_pad = _round_up(N, tn)
    else:
        tn_eff = N
        n_pad = N

    if m_pad != M:
        x = jnp.pad(x, ((0, m_pad - M), (0, 0)))
    if n_pad != N:
        w_kn = jnp.pad(w_kn, ((0, 0), (0, n_pad - N)))
        b = jnp.pad(b, ((0, n_pad - N),))
    b2d = b.reshape(1, n_pad)

    kernel = functools.partial(
        _linear_kernel, apply_act=apply_act, compute_dtype=compute_dtype
    )

    out = pl.pallas_call(
        kernel,
        out_shape=jax.ShapeDtypeStruct((m_pad, n_pad), x.dtype),
        grid_spec=pltpu.PrefetchScalarGridSpec(
            num_scalar_prefetch=0,
            grid=(m_pad // tm, n_pad // tn_eff),
            in_specs=[
                pl.BlockSpec((tm, K), lambda i, j: (i, 0)),
                pl.BlockSpec((K, tn_eff), lambda i, j: (0, j)),
                pl.BlockSpec((1, tn_eff), lambda i, j: (0, j)),
            ],
            out_specs=pl.BlockSpec((tm, tn_eff), lambda i, j: (i, j)),
        ),
        compiler_params=pltpu.CompilerParams(
            dimension_semantics=("parallel", "parallel"),
        ),
    )(x, w_kn, b2d)
    return out[:M, :N]


# ---------------------------------------------------------------------------
# MLP module (JAX/Pallas port of ClipCap's MLP(sizes, bias=True, act=nn.Tanh))
# ---------------------------------------------------------------------------
class MLP:
    def __init__(self, sizes, key, dtype=jnp.float32, compute_dtype=jnp.float32):
        self.sizes = tuple(sizes)
        self.dtype = dtype
        self.compute_dtype = compute_dtype  # set to jnp.bfloat16 for 2x MXU rate
        self.params = []
        for i in range(len(sizes) - 1):
            fan_in, fan_out = sizes[i], sizes[i + 1]
            key, kw, kb = jax.random.split(key, 3)
            bound = 1.0 / math.sqrt(fan_in)
            # stored as (in, out) == torch weight (out, in) transposed
            w_kn = jax.random.uniform(
                kw, (fan_in, fan_out), dtype, minval=-bound, maxval=bound
            )
            b = jax.random.uniform(
                kb, (fan_out,), dtype, minval=-bound, maxval=bound
            )
            self.params.append((w_kn, b))

    def _fused_vmem_estimate(self, batch):
        tm = min(_round_up(batch, 8), 256)
        itemsize = jnp.dtype(self.dtype).itemsize
        est = 2 * tm * self.sizes[0] * itemsize                 # x tile (2 bufs)
        for k, n in zip(self.sizes[:-1], self.sizes[1:]):
            est += 2 * (k * n + n) * itemsize                   # weights + bias
        est += 2 * tm * self.sizes[-1] * itemsize               # out tile (2 bufs)
        est += 2 * tm * max(self.sizes) * 4                     # f32 activation headroom
        return est

    def __call__(self, x):
        # Fuse the whole MLP whenever the weights comfortably fit VMEM
        # (conservative threshold so the same choice is safe on v7x's 64 MiB).
        if self._fused_vmem_estimate(x.shape[0]) <= 20 * 1024 * 1024:
            return mlp_fused_pallas(
                x, self.params, compute_dtype=self.compute_dtype
            )
        # TODO(synk): for ClipCap-sized layers that exceed VMEM we fall back to
        # one fused matmul+bias(+tanh) kernel per layer (activation via HBM).
        n_layers = len(self.params)
        for i, (w_kn, b) in enumerate(self.params):
            x = linear_pallas(
                x, w_kn, b,
                apply_act=i < n_layers - 1,
                compute_dtype=self.compute_dtype,
            )
        return x


def _reference(x, params):
    n_layers = len(params)
    for i, (w_kn, b) in enumerate(params):
        x = x @ w_kn + b
        if i < n_layers - 1:
            x = jnp.tanh(x)
    return x


if __name__ == "__main__":
    key = jax.random.PRNGKey(0)
    key, kx = jax.random.split(key)

    batch = 8
    sizes = (128, 256, 128)  # small analogue of ClipCap's (prefix_dim, h, out)

    x = jax.random.normal(kx, (batch, sizes[0]), jnp.float32)

    mlp = MLP(sizes, key)
    y = mlp(x)
    y = jax.block_until_ready(y)

    y_ref = _reference(x, mlp.params)
    assert y.shape == (batch, sizes[-1])
    assert jnp.allclose(y, y_ref, atol=2e-5, rtol=2e-5)

    print("KERNEL_OK")
</pallas_src>

<mosaic_0001>
module attributes {stable_mosaic.version = 11 : i64} {
  func.func @_mlp_fused_kernel(%arg0: i32, %arg1: memref<8x128xf32, #tpu.memory_space<vmem>>, %arg2: memref<128x256xf32, #tpu.memory_space<vmem>>, %arg3: memref<1x256xf32, #tpu.memory_space<vmem>>, %arg4: memref<256x128xf32, #tpu.memory_space<vmem>>, %arg5: memref<1x128xf32, #tpu.memory_space<vmem>>, %arg6: memref<8x128xf32, #tpu.memory_space<vmem>>) attributes {dimension_semantics = [#tpu.dimension_semantics<parallel>], iteration_bounds = array<i64: 1>, scalar_prefetch = 0 : i64, scratch_operands = 0 : i64, tpu.core_type = #tpu.core_type<tc>, window_params = [{transform_indices = @transform_0, window_bounds = array<i64: 8, 128>}, {pipeline_mode = #tpu.pipeline_mode<synchronous>, transform_indices = @transform_1, window_bounds = array<i64: 128, 256>}, {pipeline_mode = #tpu.pipeline_mode<synchronous>, transform_indices = @transform_2, window_bounds = array<i64: 1, 256>}, {pipeline_mode = #tpu.pipeline_mode<synchronous>, transform_indices = @transform_3, window_bounds = array<i64: 256, 128>}, {pipeline_mode = #tpu.pipeline_mode<synchronous>, transform_indices = @transform_4, window_bounds = array<i64: 1, 128>}, {transform_indices = @transform_5, window_bounds = array<i64: 8, 128>}]} {
    %c0 = arith.constant 0 : index
    %c0_0 = arith.constant 0 : index
    %0 = vector.load %arg1[%c0, %c0_0] : memref<8x128xf32, #tpu.memory_space<vmem>>, vector<8x128xf32>
    %c0_1 = arith.constant 0 : index
    %c0_2 = arith.constant 0 : index
    %1 = vector.load %arg2[%c0_1, %c0_2] : memref<128x256xf32, #tpu.memory_space<vmem>>, vector<128x256xf32>
    %cst = arith.constant dense<0.000000e+00> : vector<8x256xf32>
    %2 = tpu.matmul %0, %1, %cst {dimension_numbers = #tpu.dot_dimension_numbers<[1], [0], [0], [1], [0, 0, 1, 1], [], []>} : vector<8x128xf32>, vector<128x256xf32>, vector<8x256xf32> -> vector<8x256xf32>
    %c0_3 = arith.constant 0 : index
    %c0_4 = arith.constant 0 : index
    %3 = vector.load %arg3[%c0_3, %c0_4] : memref<1x256xf32, #tpu.memory_space<vmem>>, vector<1x256xf32>
    %4 = vector.broadcast %3 : vector<1x256xf32> to vector<8x256xf32>
    %5 = arith.addf %2, %4 : vector<8x256xf32>
    %6 = math.tanh %5 : vector<8x256xf32>
    %c0_5 = arith.constant 0 : index
    %c0_6 = arith.constant 0 : index
    %7 = vector.load %arg4[%c0_5, %c0_6] : memref<256x128xf32, #tpu.memory_space<vmem>>, vector<256x128xf32>
    %cst_7 = arith.constant dense<0.000000e+00> : vector<8x128xf32>
    %8 = tpu.matmul %6, %7, %cst_7 {dimension_numbers = #tpu.dot_dimension_numbers<[1], [0], [0], [1], [0, 0, 1, 1], [], []>} : vector<8x256xf32>, vector<256x128xf32>, vector<8x128xf32> -> vector<8x128xf32>
    %c0_8 = arith.constant 0 : index
    %c0_9 = arith.constant 0 : index
    %9 = vector.load %arg5[%c0_8, %c0_9] : memref<1x128xf32, #tpu.memory_space<vmem>>, vector<1x128xf32>
    %10 = vector.broadcast %9 : vector<1x128xf32> to vector<8x128xf32>
    %11 = arith.addf %8, %10 : vector<8x128xf32>
    %c0_10 = arith.constant 0 : index
    %c0_11 = arith.constant 0 : index
    %12 = vector.load %arg6[%c0_10, %c0_11] : memref<8x128xf32, #tpu.memory_space<vmem>>, vector<8x128xf32>
    tpu.vector_store %arg6[%c0_10, %c0_11], %11 {strides = array<i32>} : memref<8x128xf32, #tpu.memory_space<vmem>>, vector<8x128xf32>,
    return
  }
  func.func @transform_0(%arg0: i32) -> (i32, i32) {
    %c0_i32 = arith.constant 0 : i32
    %c0_i32_0 = arith.constant 0 : i32
    return %arg0, %c0_i32 : i32, i32
  }
  func.func @transform_1(%arg0: i32) -> (i32, i32) {
    %c0_i32 = arith.constant 0 : i32
    %c0_i32_0 = arith.constant 0 : i32
    %c0_i32_1 = arith.constant 0 : i32
    return %c0_i32, %c0_i32_0 : i32, i32
  }
  func.func @transform_2(%arg0: i32) -> (i32, i32) {
    %c0_i32 = arith.constant 0 : i32
    %c0_i32_0 = arith.constant 0 : i32
    %c0_i32_1 = arith.constant 0 : i32
    return %c0_i32, %c0_i32_0 : i32, i32
  }
  func.func @transform_3(%arg0: i32) -> (i32, i32) {
    %c0_i32 = arith.constant 0 : i32
    %c0_i32_0 = arith.constant 0 : i32
    %c0_i32_1 = arith.constant 0 : i32
    return %c0_i32, %c0_i32_0 : i32, i32
  }
  func.func @transform_4(%arg0: i32) -> (i32, i32) {
    %c0_i32 = arith.constant 0 : i32
    %c0_i32_0 = arith.constant 0 : i32
    %c0_i32_1 = arith.constant 0 : i32
    return %c0_i32, %c0_i32_0 : i32, i32
  }
  func.func @transform_5(%arg0: i32) -> (i32, i32) {
    %c0_i32 = arith.constant 0 : i32
    %c0_i32_0 = arith.constant 0 : i32
    return %arg0, %c0_i32 : i32, i32
  }
}

</mosaic_0001>

<llo_original>
// kernel: tpu_custom_call.1
$region0: #{tpu_custom_call.1}
  #allocation0 [shape = 'u32[]', space=smem, size = 0x4, offset = 0x4, fixed_abs, tag = 'smem constant byte address 0x4 - core index']
  #allocation1 [shape = 'u32[144,128]{1,0:T(1,128)}', space=vmem, size = 0x12000, scoped, tag = 'internal scratch']
  %s0 = inlined_call_operand.hbm [shape: f32[8,128], index: 0, kind: input, shape index: {}]
  %s1 = inlined_call_operand.hbm [shape: f32[128,256], index: 1, kind: input, shape index: {}]
  %s2 = inlined_call_operand.vmem [shape: f32[1,256], index: 2, kind: input, shape index: {}]
  %s3 = inlined_call_operand.hbm [shape: f32[256,128], index: 3, kind: input, shape index: {}]
  %s4 = inlined_call_operand.vmem [shape: f32[1,128], index: 4, kind: input, shape index: {}]
  %s5 = inlined_call_operand.hbm [shape: f32[8,128], index: 5, kind: output, shape index: {}]
  %s6 = sld [smem:[#allocation0]]
  $region42: #{tpu_custom_call.1} parent=0
    _
  %s8 = ssub.s32 1, %s6
  %s9 = scalar_select 0, %s8, %s6
  $region1: #{tpu_custom_call.1} parent=0
    #allocation2 [shape = 'u8[4096]{0}', space=vmem, size = 0x1000, scoped, tag = 'input window, operand 0, single buffered']
    #allocation3 [shape = 's32[1]{0}', space=sflag, size = 0x4, scoped, tag = 'scoped memory for tpu_custom_call.1']
    #allocation4 [shape = 's32[1]{0}', space=sflag, size = 0x4, scoped, tag = 'scoped memory for tpu_custom_call.1']
    #allocation5 [shape = 'u8[131072]{0}', space=vmem, size = 0x20000, scoped, tag = 'input window, operand 1, single buffered']
    #allocation6 [shape = 's32[1]{0}', space=sflag, size = 0x4, scoped, tag = 'scoped memory for tpu_custom_call.1']
    #allocation7 [shape = 'u8[131072]{0}', space=vmem, size = 0x20000, scoped, tag = 'input window, operand 3, single buffered']
    #allocation8 [shape = 'u8[4096]{0}', space=vmem, size = 0x1000, scoped, tag = 'output window, operand 0, single buffered']
    %10 = vsyncpa [#allocation3], 0
    %11 = vsyncpa [#allocation6], 0
    %12 = vsyncpa [#allocation4], 0
    // Predicated region
    $region2: #{tpu_custom_call.1} parent=1 // pred_check
      _
    $region3: #{tpu_custom_call.1} parent=1 // pred_check_branch
      %14 = sbr.rel (0) target = $region5
    $region4: #{tpu_custom_call.1} parent=1 // pred_region
      %s16 = ssub.s32 128, 128
      %17 = vsyncadd [#allocation3], %s16
      %s19 = sshll.u32 [#allocation2], 4
      %s20 = int_to_ptr.vmem [resolvable:$true] %s19
      %22 = dma.hbm_to_vmem [thread:$0]  %s0, 128, %s20, [#allocation3]
    $region5: #{tpu_custom_call.1} parent=1 // pred_fallthru
      _
    // Predicated region
    $region6: #{tpu_custom_call.1} parent=1 // pred_check
      _
    $region7: #{tpu_custom_call.1} parent=1 // pred_check_branch
      %24 = sbr.rel (0) target = $region9
    $region8: #{tpu_custom_call.1} parent=1 // pred_region
      %s26 = ssub.s32 4096, 4096
      %27 = vsyncadd [#allocation6], %s26
      %s28 = sshll.u32 [#allocation5], 4
      %s29 = int_to_ptr.vmem [resolvable:$true] %s28
      %34 = dma.hbm_to_vmem [thread:$0]  %s1, 4096, %s29, [#allocation6], 256, 256, 16
    $region9: #{tpu_custom_call.1} parent=1 // pred_fallthru
      _
    // Predicated region
    $region10: #{tpu_custom_call.1} parent=1 // pred_check
      _
    $region11: #{tpu_custom_call.1} parent=1 // pred_check_branch
      %36 = sbr.rel (0) target = $region13
    $region12: #{tpu_custom_call.1} parent=1 // pred_region
      _
    $region13: #{tpu_custom_call.1} parent=1 // pred_fallthru
      _
    // Predicated region
    $region14: #{tpu_custom_call.1} parent=1 // pred_check
      _
    $region15: #{tpu_custom_call.1} parent=1 // pred_check_branch
      %38 = sbr.rel (0) target = $region17
    $region16: #{tpu_custom_call.1} parent=1 // pred_region
      %s40 = ssub.s32 4096, 4096
      %41 = vsyncadd [#allocation6], %s40
      %s42 = sshll.u32 [#allocation7], 4
      %s43 = int_to_ptr.vmem [resolvable:$true] %s42
      %48 = dma.hbm_to_vmem [thread:$0]  %s3, 4096, %s43, [#allocation6], 128, 128, 8
    $region17: #{tpu_custom_call.1} parent=1 // pred_fallthru
      _
    // Predicated region
    $region18: #{tpu_custom_call.1} parent=1 // pred_check
      _
    $region19: #{tpu_custom_call.1} parent=1 // pred_check_branch
      %50 = sbr.rel (0) target = $region21
    $region20: #{tpu_custom_call.1} parent=1 // pred_region
      _
    $region21: #{tpu_custom_call.1} parent=1 // pred_fallthru
      _
    // Predicated region
    $region22: #{tpu_custom_call.1} parent=1 // pred_check
      _
    $region23: #{tpu_custom_call.1} parent=1 // pred_check_branch
      %52 = sbr.rel (0) target = $region25
    $region24: #{tpu_custom_call.1} parent=1 // pred_region
      %53 = dma.done [#allocation3], 128
    $region25: #{tpu_custom_call.1} parent=1 // pred_fallthru
      _
    // Predicated region
    $region26: #{tpu_custom_call.1} parent=1 // pred_check
      _
    $region27: #{tpu_custom_call.1} parent=1 // pred_check_branch
      %55 = sbr.rel (0) target = $region29
    $region28: #{tpu_custom_call.1} parent=1 // pred_region
      %56 = dma.done [#allocation6], 4096
    $region29: #{tpu_custom_call.1} parent=1 // pred_fallthru
      _
    // Predicated region
    $region30: #{tpu_custom_call.1} parent=1 // pred_check
      _
    $region31: #{tpu_custom_call.1} parent=1 // pred_check_branch
      %58 = sbr.rel (0) target = $region33
    $region32: #{tpu_custom_call.1} parent=1 // pred_region
      %59 = dma.done [#allocation6], 4096
    $region33: #{tpu_custom_call.1} parent=1 // pred_fallthru
      _
    %v60 = vld [vmem:[#allocation2] sm:$0xff]
    %v61 = vld [vmem:[#allocation5] sm:$0xff]
    %v62 = vld [vmem:[#allocation5 + $0x8] sm:$0xff]
    %v63 = vld [vmem:[#allocation5 + $0x10] sm:$0xff]
    %v64 = vld [vmem:[#allocation5 + $0x18] sm:$0xff]
    %v65 = vld [vmem:[#allocation5 + $0x20] sm:$0xff]
    %v66 = vld [vmem:[#allocation5 + $0x28] sm:$0xff]
    %v67 = vld [vmem:[#allocation5 + $0x30] sm:$0xff]
    %v68 = vld [vmem:[#allocation5 + $0x38] sm:$0xff]
    %v69 = vld [vmem:[#allocation5 + $0x40] sm:$0xff]
    %v70 = vld [vmem:[#allocation5 + $0x48] sm:$0xff]
    %v71 = vld [vmem:[#allocation5 + $0x50] sm:$0xff]
    %v72 = vld [vmem:[#allocation5 + $0x58] sm:$0xff]
    %v73 = vld [vmem:[#allocation5 + $0x60] sm:$0xff]
    %v74 = vld [vmem:[#allocation5 + $0x68] sm:$0xff]
    %v75 = vld [vmem:[#allocation5 + $0x70] sm:$0xff]
    %v76 = vld [vmem:[#allocation5 + $0x78] sm:$0xff]
    %v77 = vld [vmem:[#allocation5 + $0x80] sm:$0xff]
    %v78 = vld [vmem:[#allocation5 + $0x88] sm:$0xff]
    %v79 = vld [vmem:[#allocation5 + $0x90] sm:$0xff]
    %v80 = vld [vmem:[#allocation5 + $0x98] sm:$0xff]
    %v81 = vld [vmem:[#allocation5 + $0xa0] sm:$0xff]
    %v82 = vld [vmem:[#allocation5 + $0xa8] sm:$0xff]
    %v83 = vld [vmem:[#allocation5 + $0xb0] sm:$0xff]
    %v84 = vld [vmem:[#allocation5 + $0xb8] sm:$0xff]
    %v85 = vld [vmem:[#allocation5 + $0xc0] sm:$0xff]
    %v86 = vld [vmem:[#allocation5 + $0xc8] sm:$0xff]
    %v87 = vld [vmem:[#allocation5 + $0xd0] sm:$0xff]
    %v88 = vld [vmem:[#allocation5 + $0xd8] sm:$0xff]
    %v89 = vld [vmem:[#allocation5 + $0xe0] sm:$0xff]
    %v90 = vld [vmem:[#allocation5 + $0xe8] sm:$0xff]
    %v91 = vld [vmem:[#allocation5 + $0xf0] sm:$0xff]
    %v92 = vld [vmem:[#allocation5 + $0xf8] sm:$0xff]
    %v93 = vld [vmem:[%s2] sm:$0x3]
    %v95 = vlaneseq
    %v96 = vshrl.u32 %v95, 7
    %v97 = vsub.s32 0, %v96
    %v98 = vrot.slane %v93, %v97
    %v99 = vlaneseq
    %v100 = vshrl.u32 %v99, 7
    %v101 = vsub.s32 1, %v100
    %v102 = vrot.slane %v93, %v101
    %105 = vmatprep.subr.mxu0 %v92
    %106 = vmatpush1.msra.mxu0 %v91
    %107 = vmatprep.subr.mxu0 %v90
    %108 = vmatpush1.msra.mxu0 %v89
    %109 = vmatprep.subr.mxu0 %v88
    %110 = vmatpush1.msra.mxu0 %v87
    %111 = vmatprep.subr.mxu0 %v86
    %112 = vmatpush1.msra.mxu0 %v85
    %113 = vmatprep.subr.mxu0 %v84
    %114 = vmatpush1.msra.mxu0 %v83
    %115 = vmatprep.subr.mxu0 %v82
    %116 = vmatpush1.msra.mxu0 %v81
    %117 = vmatprep.subr.mxu0 %v80
    %118 = vmatpush1.msra.mxu0 %v79
    %119 = vmatprep.subr.mxu0 %v78
    %120 = vmatpush1.msra.mxu0 %v77
    %121 = vmatprep.subr.mxu0 %v76
    %122 = vmatpush1.msra.mxu0 %v75
    %123 = vmatprep.subr.mxu0 %v74
    %124 = vmatpush1.msra.mxu0 %v73
    %125 = vmatprep.subr.mxu0 %v72
    %126 = vmatpush1.msra.mxu0 %v71
    %127 = vmatprep.subr.mxu0 %v70
    %128 = vmatpush1.msra.mxu0 %v69
    %129 = vmatprep.subr.mxu0 %v68
    %130 = vmatpush1.msra.mxu0 %v67
    %131 = vmatprep.subr.mxu0 %v66
    %132 = vmatpush1.msra.mxu0 %v65
    %133 = vmatprep.subr.mxu0 %v64
    %134 = vmatpush1.msra.mxu0 %v63
    %135 = vmatprep.subr.mxu0 %v62
    %136 = vmatpush1.msra.mxu0 %v61
    %137 = vmatprep.subr.mxu0 0.0
    %138 = vmatpush2.msra.mxu0 0.0
    %139 = vmatprep.subr.mxu0 0.0
    %140 = vmatpush2.msra.mxu0 0.0
    %141 = vmatprep.subr.mxu0 0.0
    %142 = vmatpush2.msra.mxu0 0.0
    %143 = vmatprep.subr.mxu0 0.0
    %144 = vmatpush2.msra.mxu0 0.0
    %145 = vmatprep.subr.mxu0 0.0
    %146 = vmatpush2.msra.mxu0 0.0
    %147 = vmatprep.subr.mxu0 0.0
    %148 = vmatpush2.msra.mxu0 0.0
    %149 = vmatprep.subr.mxu0 0.0
    %150 = vmatpush2.msra.mxu0 0.0
    %151 = vmatprep.subr.mxu0 0.0
    %152 = vmatpush2.msra.mxu0 0.0
    %153 = vmatprep.subr.mxu0 0.0
    %154 = vmatpush2.msra.mxu0 0.0
    %155 = vmatprep.subr.mxu0 0.0
    %156 = vmatpush2.msra.mxu0 0.0
    %157 = vmatprep.subr.mxu0 0.0
    %158 = vmatpush2.msra.mxu0 0.0
    %159 = vmatprep.subr.mxu0 0.0
    %160 = vmatpush2.msra.mxu0 0.0
    %161 = vmatprep.subr.mxu0 0.0
    %162 = vmatpush2.msra.mxu0 0.0
    %163 = vmatprep.subr.mxu0 0.0
    %164 = vmatpush2.msra.mxu0 0.0
    %165 = vmatprep.subr.mxu0 0.0
    %166 = vmatpush2.msra.mxu0 0.0
    %167 = vmatprep.subr.mxu0 0.0
    %168 = vmatpush2.msra.mxu0 0.0
    %169 = vmatprep.mubr.f32.mxu0 0.0
    %170 = vmatmul.mubr.f32.gmra.mxu0 %v60
    %v171 = vpop.f32.mrf.mxu0
    %v172 = vadd.f32 %v98, %v171
    %v173 = vpop.f32.mrf.mxu0
    %v174 = vadd.f32 %v102, %v173
    %175 = vdwg.mxu0
    %v176 = vtanh.pop %v172
    %v177 = vtanh.pop %v174
    %v178 = vld [vmem:[#allocation7] sm:$0xff]
    %v179 = vld [vmem:[#allocation7 + $0x8] sm:$0xff]
    %v180 = vld [vmem:[#allocation7 + $0x10] sm:$0xff]
    %v181 = vld [vmem:[#allocation7 + $0x18] sm:$0xff]
    %v182 = vld [vmem:[#allocation7 + $0x20] sm:$0xff]
    %v183 = vld [vmem:[#allocation7 + $0x28] sm:$0xff]
    %v184 = vld [vmem:[#allocation7 + $0x30] sm:$0xff]
    %v185 = vld [vmem:[#allocation7 + $0x38] sm:$0xff]
    %v186 = vld [vmem:[#allocation7 + $0x40] sm:$0xff]
    %v187 = vld [vmem:[#allocation7 + $0x48] sm:$0xff]
    %v188 = vld [vmem:[#allocation7 + $0x50] sm:$0xff]
    %v189 = vld [vmem:[#allocation7 + $0x58] sm:$0xff]
    %v190 = vld [vmem:[#allocation7 + $0x60] sm:$0xff]
    %v191 = vld [vmem:[#allocation7 + $0x68] sm:$0xff]
    %v192 = vld [vmem:[#allocation7 + $0x70] sm:$0xff]
    %v193 = vld [vmem:[#allocation7 + $0x78] sm:$0xff]
    %v194 = vld [vmem:[#allocation7 + $0x80] sm:$0xff]
    %v195 = vld [vmem:[#allocation7 + $0x88] sm:$0xff]
    %v196 = vld [vmem:[#allocation7 + $0x90] sm:$0xff]
    %v197 = vld [vmem:[#allocation7 + $0x98] sm:$0xff]
    %v198 = vld [vmem:[#allocation7 + $0xa0] sm:$0xff]
    %v199 = vld [vmem:[#allocation7 + $0xa8] sm:$0xff]
    %v200 = vld [vmem:[#allocation7 + $0xb0] sm:$0xff]
    %v201 = vld [vmem:[#allocation7 + $0xb8] sm:$0xff]
    %v202 = vld [vmem:[#allocation7 + $0xc0] sm:$0xff]
    %v203 = vld [vmem:[#allocation7 + $0xc8] sm:$0xff]
    %v204 = vld [vmem:[#allocation7 + $0xd0] sm:$0xff]
    %v205 = vld [vmem:[#allocation7 + $0xd8] sm:$0xff]
    %v206 = vld [vmem:[#allocation7 + $0xe0] sm:$0xff]
    %v207 = vld [vmem:[#allocation7 + $0xe8] sm:$0xff]
    %v208 = vld [vmem:[#allocation7 + $0xf0] sm:$0xff]
    %v209 = vld [vmem:[#allocation7 + $0xf8] sm:$0xff]
    %v210 = vld [vmem:[%s4] sm:$0x1]
    %v212 = vlaneseq
    %v213 = vshrl.u32 %v212, 7
    %v214 = vsub.s32 0, %v213
    %v215 = vrot.slane %v210, %v214
    %217 = vmatprep.subr.mxu0 0.0
    %218 = vmatpush1.msra.mxu0 %v193
    %219 = vmatprep.subr.mxu0 0.0
    %220 = vmatpush1.msra.mxu0 %v192
    %221 = vmatprep.subr.mxu0 0.0
    %222 = vmatpush1.msra.mxu0 %v191
    %223 = vmatprep.subr.mxu0 0.0
    %224 = vmatpush1.msra.mxu0 %v190
    %225 = vmatprep.subr.mxu0 0.0
    %226 = vmatpush1.msra.mxu0 %v189
    %227 = vmatprep.subr.mxu0 0.0
    %228 = vmatpush1.msra.mxu0 %v188
    %229 = vmatprep.subr.mxu0 0.0
    %230 = vmatpush1.msra.mxu0 %v187
    %231 = vmatprep.subr.mxu0 0.0
    %232 = vmatpush1.msra.mxu0 %v186
    %233 = vmatprep.subr.mxu0 0.0
    %234 = vmatpush1.msra.mxu0 %v185
    %235 = vmatprep.subr.mxu0 0.0
    %236 = vmatpush1.msra.mxu0 %v184
    %237 = vmatprep.subr.mxu0 0.0
    %238 = vmatpush1.msra.mxu0 %v183
    %239 = vmatprep.subr.mxu0 0.0
    %240 = vmatpush1.msra.mxu0 %v182
    %241 = vmatprep.subr.mxu0 0.0
    %242 = vmatpush1.msra.mxu0 %v181
    %243 = vmatprep.subr.mxu0 0.0
    %244 = vmatpush1.msra.mxu0 %v180
    %245 = vmatprep.subr.mxu0 0.0
    %246 = vmatpush1.msra.mxu0 %v179
    %247 = vmatprep.subr.mxu0 0.0
    %248 = vmatpush1.msra.mxu0 %v178
    %249 = vmatprep.subr.mxu0 0.0
    %250 = vmatpush2.msra.mxu0 %v209
    %251 = vmatprep.subr.mxu0 0.0
    %252 = vmatpush2.msra.mxu0 %v208
    %253 = vmatprep.subr.mxu0 0.0
    %254 = vmatpush2.msra.mxu0 %v207
    %255 = vmatprep.subr.mxu0 0.0
    %256 = vmatpush2.msra.mxu0 %v206
    %257 = vmatprep.subr.mxu0 0.0
    %258 = vmatpush2.msra.mxu0 %v205
    %259 = vmatprep.subr.mxu0 0.0
    %260 = vmatpush2.msra.mxu0 %v204
    %261 = vmatprep.subr.mxu0 0.0
    %262 = vmatpush2.msra.mxu0 %v203
    %263 = vmatprep.subr.mxu0 0.0
    %264 = vmatpush2.msra.mxu0 %v202
    %265 = vmatprep.subr.mxu0 0.0
    %266 = vmatpush2.msra.mxu0 %v201
    %267 = vmatprep.subr.mxu0 0.0
    %268 = vmatpush2.msra.mxu0 %v200
    %269 = vmatprep.subr.mxu0 0.0
    %270 = vmatpush2.msra.mxu0 %v199
    %271 = vmatprep.subr.mxu0 0.0
    %272 = vmatpush2.msra.mxu0 %v198
    %273 = vmatprep.subr.mxu0 0.0
    %274 = vmatpush2.msra.mxu0 %v197
    %275 = vmatprep.subr.mxu0 0.0
    %276 = vmatpush2.msra.mxu0 %v196
    %277 = vmatprep.subr.mxu0 0.0
    %278 = vmatpush2.msra.mxu0 %v195
    %279 = vmatprep.subr.mxu0 0.0
    %280 = vmatpush2.msra.mxu0 %v194
    %281 = vmatprep.mubr.f32.mxu0 %v177
    %282 = vmatmul.mubr.f32.gmra.mxu0 %v176
    %v283 = vpop.f32.mrf.mxu0
    %v284 = vadd.f32 %v215, %v283
    %v285 = vpop.f32.mrf.mxu0
    %286 = vdwg.mxu0
    %287 = vst [vmem:[#allocation8] sm:$0xff] %v284
    // Predicated region
    $region34: #{tpu_custom_call.1} parent=1 // pred_check
      _
    $region35: #{tpu_custom_call.1} parent=1 // pred_check_branch
      %289 = sbr.rel (0) target = $region37
    $region36: #{tpu_custom_call.1} parent=1 // pred_region
      %s291 = ssub.s32 128, 128
      %292 = vsyncadd [#allocation4], %s291
      %s294 = sshll.u32 [#allocation8], 4
      %s295 = int_to_ptr.vmem [resolvable:$true] %s294
      %297 = dma.vmem_to_hbm [thread:$0]  %s295, 128, %s5, [#allocation4]
    $region37: #{tpu_custom_call.1} parent=1 // pred_fallthru
      _
    // Predicated region
    $region38: #{tpu_custom_call.1} parent=1 // pred_check
      _
    $region39: #{tpu_custom_call.1} parent=1 // pred_check_branch
      %299 = sbr.rel (0) target = $region41
    $region40: #{tpu_custom_call.1} parent=1 // pred_region
      %300 = dma.done [#allocation4], 128
    $region41: #{tpu_custom_call.1} parent=1 // pred_fallthru
      _
    %301 = vsyncpa [#allocation3], 1
    %302 = vsyncpa [#allocation6], 1
    %303 = vsyncpa [#allocation4], 1

</llo_original>
